<compile_context>
chip_gen: v6e
topology: v6e:2x2x1
jax: 0.10.0
libtpu: 0.0.40
codegen_flags: <defaults>
</compile_context>

<pallas_src>
import jax
import jax.numpy as jnp
from jax.experimental import pallas as pl
from jax.experimental.pallas import tpu as pltpu

LANE = 128
_C_CHUNK = 32  # channel-chunk size for the large-C gather path (multiple of 8)


def _round_up(x, m):
    return ((x + m - 1) // m) * m


def _choose_tiling(N, C, HW, itemsize):
    """Pick (hw_tile, n_blk): lane-dense HW tile (multiple of 128) and number
    of batch rows folded per grid step.  Target ~0.5-2 MiB of input per step
    (HBM-roofline knee on v5e/v6e/v7x) while keeping 2x double-buffered inputs
    far below every generation's scoped-VMEM limit (v7x has only 64 MiB)."""
    hw128 = _round_up(HW, LANE)
    target_bytes = 1 << 20        # ~1 MiB logits block per grid step
    max_bytes = 4 << 20           # hard cap -> double-buffered inputs <= ~16 MiB

    per_lane_logits = max(C * itemsize, 1)
    per_lane_total = C * itemsize + 4            # + int32 target per lane
    want_lanes = _round_up(max(LANE, target_bytes // per_lane_logits), LANE)
    cap_lanes = max(LANE, (max_bytes // per_lane_total) // LANE * LANE)
    hw_tile = min(want_lanes, cap_lanes, 32768, hw128)
    hw_tile = max(hw_tile, LANE)

    n_blk = 1
    if hw_tile == hw128:          # one lane tile spans HW -> fold batch rows
        per_batch = hw_tile * per_lane_total
        for d in range(1, N + 1):
            if N % d:
                continue
            if d > 1 and d * per_batch > max_bytes:
                break
            n_blk = d
            if d * per_batch >= target_bytes:
                break
        # Megacore (v7x): keep the batch grid axis shardable (extent >= 2) when
        # a smaller fold already reaches a reasonable block size.
        if n_blk == N and N >= 2:
            smaller = max((d for d in range(1, N) if N % d == 0), default=1)
            if smaller * per_batch >= (512 << 10):
                n_blk = smaller
    return hw_tile, n_blk


def _gather_target_prob(logits_ref, tgt, C, n_blk, hw_tile):
    """picked[b, 0, l] = logits[b, target[b, 0, l], l] as f32, via masked
    select + channel (sublane) reduce.  tgt: (n_blk, 1, hw_tile) int32."""
    if C > 2 * _C_CHUNK:
        n_full = C // _C_CHUNK
        rem = C - n_full * _C_CHUNK
        # Hoist the iota out of the loop; compare against (tgt - start).
        ids = jax.lax.broadcasted_iota(jnp.int32, (n_blk, _C_CHUNK, hw_tile), 1)

        def body(c, acc):
            start = pl.multiple_of(c * _C_CHUNK, _C_CHUNK)
            chunk = logits_ref[:, pl.ds(start, _C_CHUNK), :].astype(jnp.float32)
            hit = ids == (tgt - start)
            return acc + jnp.sum(jnp.where(hit, chunk, 0.0), axis=1, keepdims=True)

        picked = jax.lax.fori_loop(
            0, n_full, body,
            jnp.zeros((n_blk, 1, hw_tile), jnp.float32),
            unroll=min(8, n_full))
        if rem:
            start = n_full * _C_CHUNK
            chunk = logits_ref[:, pl.ds(start, rem), :].astype(jnp.float32)
            ids_t = jax.lax.broadcasted_iota(jnp.int32, (n_blk, rem, hw_tile), 1)
            picked = picked + jnp.sum(jnp.where(ids_t == (tgt - start), chunk, 0.0),
                                      axis=1, keepdims=True)
    else:
        logits = logits_ref[...].astype(jnp.float32)        # (n_blk, C, hw_tile)
        ids = jax.lax.broadcasted_iota(jnp.int32, logits.shape, 1)
        picked = jnp.sum(jnp.where(ids == tgt, logits, 0.0), axis=1, keepdims=True)
    return picked


def _lane_mask(n_blk, hw_tile, HW):
    """Validity of each lane of the current tile, derived from the lane index
    (NOT from possibly-garbage out-of-bounds targets)."""
    lane = jax.lax.broadcasted_iota(jnp.int32, (n_blk, 1, hw_tile), 2)
    return (pl.program_id(1) * hw_tile + lane) < HW


def _make_lossmap_kernel(C, n_blk, hw_tile, HW, masked):
    def kernel(logits_ref, target_ref, loss_ref):
        tgt = target_ref[...]                                # (n_blk, 1, hw_tile)
        picked = _gather_target_prob(logits_ref, tgt, C, n_blk, hw_tile)
        loss = -jnp.log(picked)
        if masked:
            loss = jnp.where(_lane_mask(n_blk, hw_tile, HW), loss, 0.0)
        loss_ref[...] = loss.astype(loss_ref.dtype)
    return kernel


def _make_sum_kernel(C, n_blk, hw_tile, HW, masked):
    def kernel(logits_ref, target_ref, acc_ref):
        # acc_ref: (n_blk, 1, 1) f32, resident across the lane-tile axis.
        @pl.when(pl.program_id(1) == 0)
        def _():
            acc_ref[...] = jnp.zeros_like(acc_ref)

        tgt = target_ref[...]
        picked = _gather_target_prob(logits_ref, tgt, C, n_blk, hw_tile)
        loss = -jnp.log(picked)
        if masked:
            loss = jnp.where(_lane_mask(n_blk, hw_tile, HW), loss, 0.0)
        acc_ref[...] += jnp.sum(loss, axis=2, keepdims=True)  # XLU lane reduce
    return kernel


def cross_entropy_loss(logits, target, reduction='mean'):
    """logits: (N, C, H, W) probabilities (f32 or bf16); target: (N, H, W) int."""
    N, C, H, W = logits.shape
    HW = H * W
    in_dtype = logits.dtype
    itemsize = jnp.dtype(in_dtype).itemsize

    hw_tile, n_blk = _choose_tiling(N, C, HW, itemsize)
    num_tiles = pl.cdiv(HW, hw_tile)
    grid_n = N // n_blk
    grid = (grid_n, num_tiles)
    masked = (HW % hw_tile) != 0

    # Free (metadata-only) views; no padding / dtype copy pass over logits.
    logits3 = logits.reshape(N, C, HW)
    target3 = target.astype(jnp.int32).reshape(N, 1, HW)

    in_specs = [
        pl.BlockSpec((n_blk, C, hw_tile), lambda n, t: (n, 0, t)),
        pl.BlockSpec((n_blk, 1, hw_tile), lambda n, t: (n, 0, t)),
    ]
    block_in_bytes = n_blk * hw_tile * (C * itemsize + 4)
    vmem_limit = int(min(48 * 1024 * 1024,
                         max(32 * 1024 * 1024, 4 * block_in_bytes + (4 << 20))))
    in_bytes = N * C * HW * itemsize + N * HW * 4

    # TODO(synk): no ignore_index / class-weight handling (absent in the
    # original module too); out-of-range targets yield picked=0 -> +inf loss.

    if reduction in ('mean', 'sum'):
        # Resident per-batch-block accumulator; lane-tile axis is the reduction
        # ("arbitrary") axis, batch axis stays "parallel" (megacore-friendly).
        partials = pl.pallas_call(
            _make_sum_kernel(C, n_blk, hw_tile, HW, masked),
            out_shape=jax.ShapeDtypeStruct((N, 1, 1), jnp.float32),
            grid_spec=pltpu.PrefetchScalarGridSpec(
                num_scalar_prefetch=0,
                grid=grid,
                in_specs=in_specs,
                out_specs=pl.BlockSpec((n_blk, 1, 1), lambda n, t: (n, 0, 0)),
            ),
            compiler_params=pltpu.CompilerParams(
                dimension_semantics=("parallel", "arbitrary"),
                vmem_limit_bytes=vmem_limit,
            ),
            cost_estimate=pl.CostEstimate(
                flops=3 * N * C * HW,
                transcendentals=N * HW,
                bytes_accessed=in_bytes + N * 4,
            ),
        )(logits3, target3)
        total = jnp.sum(partials)
        if reduction == 'mean':
            total = total / jnp.float32(N * HW)
        return total

    # reduction == 'none': lane-dense lossmap (no padding; edge writeback is
    # clipped by Pallas), reshaped back to (N, H, W).
    lossmap = pl.pallas_call(
        _make_lossmap_kernel(C, n_blk, hw_tile, HW, masked),
        out_shape=jax.ShapeDtypeStruct((N, 1, HW), in_dtype),
        grid_spec=pltpu.PrefetchScalarGridSpec(
            num_scalar_prefetch=0,
            grid=grid,
            in_specs=in_specs,
            out_specs=pl.BlockSpec((n_blk, 1, hw_tile), lambda n, t: (n, 0, t)),
        ),
        compiler_params=pltpu.CompilerParams(
            dimension_semantics=("parallel", "parallel"),
            vmem_limit_bytes=vmem_limit,
        ),
        cost_estimate=pl.CostEstimate(
            flops=3 * N * C * HW,
            transcendentals=N * HW,
            bytes_accessed=in_bytes + N * HW * itemsize,
        ),
    )(logits3, target3)
    return lossmap.reshape(N, H, W)


if __name__ == "__main__":
    key = jax.random.PRNGKey(0)
    k1, k2 = jax.random.split(key)

    N, C, H, W = 2, 4, 16, 16
    # The PyTorch module consumes probabilities (it applies -log then gathers),
    # so build valid probabilities with a softmax over the channel axis.
    raw = jax.random.normal(k1, (N, C, H, W), dtype=jnp.float32)
    probs = jax.nn.softmax(raw, axis=1)
    target = jax.random.randint(k2, (N, H, W), 0, C, dtype=jnp.int32)

    # Pure-JAX reference (mirrors the PyTorch forward exactly).
    picked = jnp.take_along_axis(probs, target[:, None, :, :], axis=1)[:, 0]
    ref_map = -jnp.log(picked)

    out_mean = cross_entropy_loss(probs, target, reduction='mean')
    out_sum = cross_entropy_loss(probs, target, reduction='sum')
    out_none = cross_entropy_loss(probs, target, reduction='none')
    out_mean, out_sum, out_none = jax.block_until_ready((out_mean, out_sum, out_none))

    assert jnp.allclose(out_mean, jnp.mean(ref_map), rtol=1e-5, atol=1e-5), (out_mean, jnp.mean(ref_map))
    assert jnp.allclose(out_sum, jnp.sum(ref_map), rtol=1e-5, atol=1e-5), (out_sum, jnp.sum(ref_map))
    assert jnp.allclose(out_none, ref_map, rtol=1e-5, atol=1e-5)

    # Non-multiple-of-128 spatial size exercises the unpadded masked-tail path.
    H2, W2 = 10, 10
    raw2 = jax.random.normal(k1, (N, C, H2, W2), dtype=jnp.float32)
    probs2 = jax.nn.softmax(raw2, axis=1)
    target2 = jax.random.randint(k2, (N, H2, W2), 0, C, dtype=jnp.int32)
    picked2 = jnp.take_along_axis(probs2, target2[:, None, :, :], axis=1)[:, 0]
    out2 = jax.block_until_ready(cross_entropy_loss(probs2, target2, reduction='mean'))
    assert jnp.allclose(out2, jnp.mean(-jnp.log(picked2)), rtol=1e-5, atol=1e-5), (out2,)

    # bf16 logits exercise the native-bf16 read / f32-compute path.
    probs_bf = probs.astype(jnp.bfloat16)
    picked_bf = jnp.take_along_axis(probs_bf.astype(jnp.float32),
                                    target[:, None, :, :], axis=1)[:, 0]
    ref_bf = jnp.mean(-jnp.log(picked_bf))
    out_bf = jax.block_until_ready(cross_entropy_loss(probs_bf, target, reduction='mean'))
    assert jnp.allclose(out_bf, ref_bf, rtol=5e-3, atol=5e-3), (out_bf, ref_bf)

    print("KERNEL_OK")
</pallas_src>

<mosaic_0001>
module attributes {stable_mosaic.version = 11 : i64} {
  func.func @kernel(%arg0: i32, %arg1: i32, %arg2: memref<2x4x256xf32, #tpu.memory_space<vmem>>, %arg3: memref<2x1x256xi32, #tpu.memory_space<vmem>>, %arg4: memref<2x1x1xf32, #tpu.memory_space<vmem>>) attributes {dimension_semantics = [#tpu.dimension_semantics<parallel>, #tpu.dimension_semantics<arbitrary>], iteration_bounds = array<i64: 1, 1>, scalar_prefetch = 0 : i64, scratch_operands = 0 : i64, tpu.core_type = #tpu.core_type<tc>, window_params = [{transform_indices = @transform_0, window_bounds = array<i64: 2, 4, 256>}, {transform_indices = @transform_1, window_bounds = array<i64: 2, 1, 256>}, {transform_indices = @transform_2, window_bounds = array<i64: 2, 1, 1>}]} {
    %c0_i32 = arith.constant 0 : i32
    %0 = arith.cmpi eq, %arg1, %c0_i32 : i32
    %1 = arith.extui %0 : i1 to i32
    %c0_i32_0 = arith.constant 0 : i32
    %2 = arith.cmpi ne, %1, %c0_i32_0 : i32
    scf.if %2 {
      %cst_15 = arith.constant 0.000000e+00 : f32
      %20 = vector.broadcast %cst_15 : f32 to vector<2x1x1xf32>
      %c0_16 = arith.constant 0 : index
      %c0_17 = arith.constant 0 : index
      %c0_18 = arith.constant 0 : index
      %21 = vector.load %arg4[%c0_16, %c0_17, %c0_18] : memref<2x1x1xf32, #tpu.memory_space<vmem>>, vector<2x1x1xf32>
      tpu.vector_store %arg4[%c0_16, %c0_17, %c0_18], %20 {strides = array<i32>} : memref<2x1x1xf32, #tpu.memory_space<vmem>>, vector<2x1x1xf32>,
    } else {
    }
    %c0 = arith.constant 0 : index
    %c0_1 = arith.constant 0 : index
    %c0_2 = arith.constant 0 : index
    %3 = vector.load %arg3[%c0, %c0_1, %c0_2] : memref<2x1x256xi32, #tpu.memory_space<vmem>>, vector<2x1x256xi32>
    %c0_3 = arith.constant 0 : index
    %c0_4 = arith.constant 0 : index
    %c0_5 = arith.constant 0 : index
    %4 = vector.load %arg2[%c0_3, %c0_4, %c0_5] : memref<2x4x256xf32, #tpu.memory_space<vmem>>, vector<2x4x256xf32>
    %5 = tpu.iota {dimensions = array<i32: 1>} : vector<2x4x256xi32>
    %6 = vector.broadcast %3 : vector<2x1x256xi32> to vector<2x4x256xi32>
    %7 = arith.cmpi eq, %5, %6 : vector<2x4x256xi32>
    %cst = arith.constant 0.000000e+00 : f32
    %8 = vector.broadcast %cst : f32 to vector<2x4x256xf32>
    %9 = arith.select %7, %4, %8 : vector<2x4x256xi1>, vector<2x4x256xf32>
    %cst_6 = arith.constant dense<0.000000e+00> : vector<2x256xf32>
    %10 = vector.multi_reduction <add>, %9, %cst_6 [1] : vector<2x4x256xf32> to vector<2x256xf32>
    %11 = vector.shape_cast %10 : vector<2x256xf32> to vector<2x1x256xf32>
    %12 = math.log %11 : vector<2x1x256xf32>
    %cst_7 = arith.constant 0.000000e+00 : f32
    %13 = vector.broadcast %cst_7 : f32 to vector<2x1x256xf32>
    %14 = arith.subf %13, %12 : vector<2x1x256xf32>
    %c0_8 = arith.constant 0 : index
    %c0_9 = arith.constant 0 : index
    %c0_10 = arith.constant 0 : index
    %15 = vector.load %arg4[%c0_8, %c0_9, %c0_10] : memref<2x1x1xf32, #tpu.memory_space<vmem>>, vector<2x1x1xf32>
    %cst_11 = arith.constant dense<0.000000e+00> : vector<2x1xf32>
    %16 = vector.multi_reduction <add>, %14, %cst_11 [2] : vector<2x1x256xf32> to vector<2x1xf32>
    %17 = vector.shape_cast %16 : vector<2x1xf32> to vector<2x1x1xf32>
    %18 = arith.addf %15, %17 : vector<2x1x1xf32>
    %c0_12 = arith.constant 0 : index
    %c0_13 = arith.constant 0 : index
    %c0_14 = arith.constant 0 : index
    %19 = vector.load %arg4[%c0_12, %c0_13, %c0_14] : memref<2x1x1xf32, #tpu.memory_space<vmem>>, vector<2x1x1xf32>
    tpu.vector_store %arg4[%c0_12, %c0_13, %c0_14], %18 {strides = array<i32>} : memref<2x1x1xf32, #tpu.memory_space<vmem>>, vector<2x1x1xf32>,
    return
  }
  func.func @transform_0(%arg0: i32, %arg1: i32) -> (i32, i32, i32) {
    %c0_i32 = arith.constant 0 : i32
    %c0_i32_0 = arith.constant 0 : i32
    return %arg0, %c0_i32, %arg1 : i32, i32, i32
  }
  func.func @transform_1(%arg0: i32, %arg1: i32) -> (i32, i32, i32) {
    %c0_i32 = arith.constant 0 : i32
    %c0_i32_0 = arith.constant 0 : i32
    return %arg0, %c0_i32, %arg1 : i32, i32, i32
  }
  func.func @transform_2(%arg0: i32, %arg1: i32) -> (i32, i32, i32) {
    %c0_i32 = arith.constant 0 : i32
    %c0_i32_0 = arith.constant 0 : i32
    %c0_i32_1 = arith.constant 0 : i32
    return %arg0, %c0_i32, %c0_i32_0 : i32, i32, i32
  }
}

</mosaic_0001>

<llo_original>
// kernel: tpu_custom_call.1
$region0: #{tpu_custom_call.1}
  #allocation0 [shape = 'u32[]', space=smem, size = 0x4, offset = 0x4, fixed_abs, tag = 'smem constant byte address 0x4 - core index']
  #allocation1 [shape = 'u32[144,128]{1,0:T(1,128)}', space=vmem, size = 0x12000, scoped, tag = 'internal scratch']
  %s0 = inlined_call_operand.hbm [shape: f32[2,4,256], index: 0, kind: input, shape index: {}]
  %s1 = inlined_call_operand.hbm [shape: s32[2,1,256], index: 1, kind: input, shape index: {}]
  %s2 = inlined_call_operand.vmem [shape: f32[2,1,1], index: 2, kind: output, shape index: {}]
  %s3 = sld [smem:[#allocation0]]
  $region30: #{tpu_custom_call.1} parent=0
    _
  %s5 = ssub.s32 1, %s3
  %s6 = scalar_select 0, %s5, %s3
  $region1: #{tpu_custom_call.1} parent=0
    #allocation2 [shape = 'u8[8192]{0}', space=vmem, size = 0x2000, scoped, tag = 'input window, operand 0, single buffered']
    #allocation3 [shape = 's32[1]{0}', space=sflag, size = 0x4, scoped, tag = 'scoped memory for tpu_custom_call.1']
    #allocation4 [shape = 'u8[2048]{0}', space=vmem, size = 0x800, scoped, tag = 'input window, operand 1, single buffered']
    #allocation5 [shape = 's32[1]{0}', space=sflag, size = 0x4, scoped, tag = 'scoped memory for tpu_custom_call.1']
    %7 = vsyncpa [#allocation3], 0
    %8 = vsyncpa [#allocation5], 0
    // Predicated region
    $region2: #{tpu_custom_call.1} parent=1 // pred_check
      _
    $region3: #{tpu_custom_call.1} parent=1 // pred_check_branch
      %10 = sbr.rel (0) target = $region5
    $region4: #{tpu_custom_call.1} parent=1 // pred_region
      %s12 = ssub.s32 256, 256
      %13 = vsyncadd [#allocation3], %s12
      %s14 = sshll.u32 [#allocation2], 4
      %s15 = int_to_ptr.vmem [resolvable:$true] %s14
      %20 = dma.hbm_to_vmem [thread:$0]  %s0, 256, %s15, [#allocation3], 128, 128, 8
    $region5: #{tpu_custom_call.1} parent=1 // pred_fallthru
      _
    // Predicated region
    $region6: #{tpu_custom_call.1} parent=1 // pred_check
      _
    $region7: #{tpu_custom_call.1} parent=1 // pred_check_branch
      %22 = sbr.rel (0) target = $region9
    $region8: #{tpu_custom_call.1} parent=1 // pred_region
      %s24 = ssub.s32 64, 64
      %25 = vsyncadd [#allocation5], %s24
      %s26 = sshll.u32 [#allocation4], 4
      %s27 = int_to_ptr.vmem [resolvable:$true] %s26
      %32 = dma.hbm_to_vmem [thread:$0]  %s1, 64, %s27, [#allocation5], 32, 32, 2
    $region9: #{tpu_custom_call.1} parent=1 // pred_fallthru
      _
    // Predicated region
    $region10: #{tpu_custom_call.1} parent=1 // pred_check
      _
    $region11: #{tpu_custom_call.1} parent=1 // pred_check_branch
      %34 = sbr.rel (0) target = $region13
    $region12: #{tpu_custom_call.1} parent=1 // pred_region
      %35 = dma.done [#allocation3], 256
    $region13: #{tpu_custom_call.1} parent=1 // pred_fallthru
      _
    // Predicated region
    $region14: #{tpu_custom_call.1} parent=1 // pred_check
      _
    $region15: #{tpu_custom_call.1} parent=1 // pred_check_branch
      %37 = sbr.rel (0) target = $region17
    $region16: #{tpu_custom_call.1} parent=1 // pred_region
      %38 = dma.done [#allocation5], 64
    $region17: #{tpu_custom_call.1} parent=1 // pred_fallthru
      _
    %p39 = scmp.eq.s32.totalorder 0, 0
    // Predicated region
    $region18: #{tpu_custom_call.1} parent=1 // pred_check
      %p40 = pneg %p39
    $region19: #{tpu_custom_call.1} parent=1 // pred_check_branch
      %42 = sbr.rel (%p40) target = $region21
    $region20: #{tpu_custom_call.1} parent=1 // pred_region
      %vm43 = vcmask 0
      %44 = vst.msk [vmem:[%s2] sm:$0x1] %vm43, 0.0
      %45 = vst.msk [vmem:[%s2 + $0x1] sm:$0x1] %vm43, 0.0
    $region21: #{tpu_custom_call.1} parent=1 // pred_fallthru
      _
    %v46 = vld [vmem:[#allocation4] sm:$0x3]
    %v47 = vld [vmem:[#allocation4 + $0x2] sm:$0x3]
    %v48 = vld [vmem:[#allocation2] sm:$0xff]
    %v49 = vld [vmem:[#allocation2 + $0x8] sm:$0xff]
    %v50 = vlaneseq
    %v51 = vshrl.u32 %v50, 7
    %v52 = vlaneseq
    %v53 = vshrl.u32 %v52, 7
    %v54 = vsub.s32 0, %v53
    %v55 = vrot.slane %v46, %v54
    %v56 = vlaneseq
    %v57 = vshrl.u32 %v56, 7
    %v58 = vsub.s32 1, %v57
    %v59 = vrot.slane %v46, %v58
    %v60 = vlaneseq
    %v61 = vshrl.u32 %v60, 7
    %v62 = vsub.s32 0, %v61
    %v63 = vrot.slane %v47, %v62
    %v64 = vlaneseq
    %v65 = vshrl.u32 %v64, 7
    %v66 = vsub.s32 1, %v65
    %v67 = vrot.slane %v47, %v66
    %vm68 = vcmp.eq.s32.totalorder %v51, %v55
    %vm69 = vcmp.eq.s32.totalorder %v51, %v59
    %vm70 = vcmp.eq.s32.totalorder %v51, %v63
    %vm71 = vcmp.eq.s32.totalorder %v51, %v67
    %v74 = vcombine.high %v48, %v48
    %v75 = vcombine.high %v49, %v49
    %v78 = vsel %vm68, %v48, 0.0
    %v79 = vsel %vm69, %v74, 0.0
    %v80 = vsel %vm70, %v49, 0.0
    %v81 = vsel %vm71, %v75, 0.0
    %vm82 = vcmask 1043456
    %v83 = vsel %vm82, %v78, 0.0
    %v84 = vrot.slane %v83, 4
    %v85 = vadd.f32 %v83, %v84
    %v86 = vrot.slane %v85, 2
    %v87 = vadd.f32 %v85, %v86
    %v88 = vrot.slane %v87, 1
    %v89 = vadd.f32 %v87, %v88
    %v90 = vsel %vm82, %v79, 0.0
    %v91 = vrot.slane %v90, 4
    %v92 = vadd.f32 %v90, %v91
    %v93 = vrot.slane %v92, 2
    %v94 = vadd.f32 %v92, %v93
    %v95 = vrot.slane %v94, 1
    %v96 = vadd.f32 %v94, %v95
    %v97 = vsel %vm82, %v80, 0.0
    %v98 = vrot.slane %v97, 4
    %v99 = vadd.f32 %v97, %v98
    %v100 = vrot.slane %v99, 2
    %v101 = vadd.f32 %v99, %v100
    %v102 = vrot.slane %v101, 1
    %v103 = vadd.f32 %v101, %v102
    %v104 = vsel %vm82, %v81, 0.0
    %v105 = vrot.slane %v104, 4
    %v106 = vadd.f32 %v104, %v105
    %v107 = vrot.slane %v106, 2
    %v108 = vadd.f32 %v106, %v107
    %v109 = vrot.slane %v108, 1
    %v110 = vadd.f32 %v108, %v109
    %v111 = vlog2.pop %v89
    %v112 = vmul.f32 %v111, 0.6931472
    %v113 = vlog2.pop %v96
    %v114 = vmul.f32 %v113, 0.6931472
    %v115 = vlog2.pop %v103
    %v116 = vmul.f32 %v115, 0.6931472
    %v117 = vlog2.pop %v110
    %v118 = vmul.f32 %v117, 0.6931472
    %v119 = vsub.f32 0.0, %v112
    %v120 = vsub.f32 0.0, %v114
    %v121 = vsub.f32 0.0, %v116
    %v122 = vsub.f32 0.0, %v118
    %v123 = vld [vmem:[%s2] sm:$0x1]
    %v124 = vld [vmem:[%s2 + $0x1] sm:$0x1]
    %v125 = vadd.f32 %v119, %v120
    %126 = vadd.xlane.f32.xlu0 %v125
    %v127 = vpop.xlane.xlu0 %126
    %v128 = vadd.f32 %v121, %v122
    %129 = vadd.xlane.f32.xlu0 %v128
    %v130 = vpop.xlane.xlu0 %129
    %v131 = vadd.f32 %v123, %v127
    %v132 = vadd.f32 %v124, %v130
    %vm133 = vcmask 0
    %134 = vst.msk [vmem:[%s2] sm:$0x1] %vm133, %v131
    %135 = vst.msk [vmem:[%s2 + $0x1] sm:$0x1] %vm133, %v132
    // Predicated region
    $region22: #{tpu_custom_call.1} parent=1 // pred_check
      _
    $region23: #{tpu_custom_call.1} parent=1 // pred_check_branch
      %137 = sbr.rel (0) target = $region25
    $region24: #{tpu_custom_call.1} parent=1 // pred_region
      _
    $region25: #{tpu_custom_call.1} parent=1 // pred_fallthru
      _
    // Predicated region
    $region26: #{tpu_custom_call.1} parent=1 // pred_check
      _
    $region27: #{tpu_custom_call.1} parent=1 // pred_check_branch
      %139 = sbr.rel (0) target = $region29
    $region28: #{tpu_custom_call.1} parent=1 // pred_region
      _
    $region29: #{tpu_custom_call.1} parent=1 // pred_fallthru
      _
    %140 = vsyncpa [#allocation3], 1
    %141 = vsyncpa [#allocation5], 1

</llo_original>
